<compile_context>
chip_gen: v6e
topology: v6e:2x2x1
jax: 0.10.0
libtpu: 0.0.40
codegen_flags: <defaults>
</compile_context>

<pallas_src>
import numpy as np
import jax
import jax.numpy as jnp
from jax.experimental import pallas as pl
from jax.experimental.pallas import tpu as pltpu


# ----------------------------------------------------------------------------
# Weight construction (identical to the PyTorch module's scipy gaussian_filter)
# ----------------------------------------------------------------------------

def gaussian_impulse_1d(kernel_size: int, sigma: float) -> np.ndarray:
    """1-D impulse response of scipy.ndimage.gaussian_filter (truncate=4.0, mode='reflect')
    applied to a length-`kernel_size` centered impulse. The module's 2-D kernel is exactly
    the outer product of this vector with itself."""
    assert kernel_size % 2 == 1
    side = (kernel_size - 1) // 2
    lw = int(4.0 * float(sigma) + 0.5)
    xs = np.arange(-lw, lw + 1, dtype=np.float64)
    g = np.exp(-0.5 * xs * xs / (float(sigma) ** 2))
    g = g / g.sum()

    e = np.zeros((kernel_size,), dtype=np.float64)
    e[side] = 1.0
    padded = np.pad(e, (lw, lw), mode="symmetric")  # scipy 'reflect' == numpy 'symmetric'
    h = np.zeros((kernel_size,), dtype=np.float64)
    for t in range(2 * lw + 1):
        h += g[t] * padded[t:t + kernel_size]
    return h


def gaussian_impulse_2d(kernel_size: int, sigma: float) -> np.ndarray:
    """2-D construction identical to DiscreteGaussian.weights_init (cross-check / reference)."""
    assert kernel_size % 2 == 1
    side = (kernel_size - 1) // 2
    lw = int(4.0 * float(sigma) + 0.5)
    xs = np.arange(-lw, lw + 1, dtype=np.float64)
    g = np.exp(-0.5 * xs * xs / (float(sigma) ** 2))
    g = g / g.sum()

    arr = np.zeros((kernel_size, kernel_size), dtype=np.float64)
    arr[side, side] = 1.0
    for axis in (0, 1):
        pad_width = [(lw, lw) if a == axis else (0, 0) for a in range(2)]
        padded = np.pad(arr, pad_width, mode="symmetric")
        out = np.zeros_like(arr)
        for t in range(2 * lw + 1):
            if axis == 0:
                out += g[t] * padded[t:t + kernel_size, :]
            else:
                out += g[t] * padded[:, t:t + kernel_size]
        arr = out
    return arr


# ----------------------------------------------------------------------------
# Constant axis operators: reflection pad + 1-D Gaussian conv, baked at trace time
# ----------------------------------------------------------------------------

def _reflect_index(i: int, n: int) -> int:
    """Reflect without repeating the edge (PyTorch ReflectionPad2d / np mode='reflect')."""
    if n == 1:
        return 0
    while i < 0 or i >= n:
        if i < 0:
            i = -i
        else:
            i = 2 * (n - 1) - i
    return i


def _build_axis_operators(H: int, W: int, K: int, p: int, taps: np.ndarray):
    """A: (Ho, H) row operator, B: (W, Wo) column operator, so out = A @ x @ B reproduces
    ReflectionPad2d(p) followed by the separable K x K Gaussian cross-correlation."""
    Ho = H + 2 * p - K + 1
    Wo = W + 2 * p - K + 1
    A = np.zeros((Ho, H), dtype=np.float64)
    for i in range(Ho):
        for ki in range(K):
            A[i, _reflect_index(i + ki - p, H)] += taps[ki]
    B = np.zeros((W, Wo), dtype=np.float64)
    for j in range(Wo):
        for kj in range(K):
            B[_reflect_index(j + kj - p, W), j] += taps[kj]
    return A, B


# ----------------------------------------------------------------------------
# Pallas kernel: two MXU matmuls over the lane-dense packing
# ----------------------------------------------------------------------------

def _conv_kernel(xr_ref, a_ref, bd_ref, o_ref):
    # xr: (H, N*C*W) packed image, a: (Ho, H) row operator (reflect + vertical Gaussian),
    # bd: (N*C*W, N*C*Wo) block-diagonal column operator (reflect + horizontal Gaussian).
    xr = xr_ref[...]
    y = jnp.dot(a_ref[...], xr, preferred_element_type=jnp.float32)        # (Ho, N*C*W)
    out = jnp.dot(y, bd_ref[...], preferred_element_type=jnp.float32)      # (Ho, N*C*Wo)
    o_ref[...] = out.astype(o_ref.dtype)


def make_discrete_gaussian(kernel_size: int, sigma: float = 1.0, padding: bool = True):
    """Returns forward(x) for x: [N, C, H, W] float32. The PyTorch module fixes C=3, but any C
    works since every depthwise channel uses the same Gaussian kernel."""
    K = kernel_size
    assert K % 2 == 1
    side = (K - 1) // 2
    p = side if padding else 0
    taps = gaussian_impulse_1d(K, sigma)  # trace-time constants

    def forward(x):
        assert x.ndim == 4
        N, C, H, W = x.shape
        if p > 0:
            assert p < H and p < W, "ReflectionPad2d requires pad < spatial dim"
        Ho = H + 2 * p - K + 1
        Wo = W + 2 * p - K + 1
        NC = N * C

        # Constant operators (reflection pad folded in), DMA'd once into VMEM.
        A_np, B_np = _build_axis_operators(H, W, K, p, taps)
        A = jnp.asarray(A_np, dtype=jnp.float32)                              # (Ho, H)
        Bd = jnp.asarray(np.kron(np.eye(NC), B_np), dtype=jnp.float32)        # (NC*W, NC*Wo)

        # Lane-dense packing: (N, C, H, W) -> (H, N*C*W); lane width N*C*W (=96 for the test).
        xr = jnp.transpose(x, (2, 0, 1, 3)).reshape(H, NC * W).astype(jnp.float32)

        out_packed = pl.pallas_call(
            _conv_kernel,
            out_shape=jax.ShapeDtypeStruct((Ho, NC * Wo), jnp.float32),
            grid_spec=pltpu.PrefetchScalarGridSpec(
                num_scalar_prefetch=0,
                grid=(1,),  # single step: the whole problem is fixed-overhead bound at this size
                in_specs=[
                    pl.BlockSpec((H, NC * W), lambda i: (0, 0)),
                    pl.BlockSpec((Ho, H), lambda i: (0, 0)),
                    pl.BlockSpec((NC * W, NC * Wo), lambda i: (0, 0)),
                ],
                out_specs=pl.BlockSpec((Ho, NC * Wo), lambda i: (0, 0)),
            ),
            compiler_params=pltpu.CompilerParams(
                dimension_semantics=("arbitrary",)),
        )(xr, A, Bd)

        # Unpack back to NCHW.
        out = out_packed.reshape(Ho, N, C, Wo).transpose(1, 2, 0, 3)
        return out.astype(x.dtype)

    return forward


# ----------------------------------------------------------------------------
# Pure-jnp reference: reflect pad + direct K x K sliding-window depthwise conv
# ----------------------------------------------------------------------------

def _reference_forward(x, k2d, kernel_size, padding=True):
    N, C, H, W = x.shape
    K = kernel_size
    p = (K - 1) // 2 if padding else 0
    xp = jnp.pad(x, ((0, 0), (0, 0), (p, p), (p, p)), mode="reflect") if p > 0 else x
    Ho, Wo = xp.shape[2] - K + 1, xp.shape[3] - K + 1
    w = jnp.asarray(k2d, jnp.float32)
    acc = jnp.zeros((N, C, Ho, Wo), jnp.float32)
    for ki in range(K):
        for kj in range(K):
            acc = acc + w[ki, kj] * xp[:, :, ki:ki + Ho, kj:kj + Wo]
    return acc.astype(x.dtype)


if __name__ == "__main__":
    kernel_size = 5
    sigma = 1.0

    # Sanity check: outer(h, h) reproduces the module's 2-D gaussian_filter impulse kernel.
    h = gaussian_impulse_1d(kernel_size, sigma)
    k2d = gaussian_impulse_2d(kernel_size, sigma)
    assert np.allclose(np.outer(h, h), k2d, atol=1e-12)

    key = jax.random.PRNGKey(0)
    x = jax.random.normal(key, (2, 3, 16, 16), dtype=jnp.float32)  # NCHW; C=3 fixed by the module

    fwd = make_discrete_gaussian(kernel_size, sigma, padding=True)
    out = jax.block_until_ready(fwd(x))

    ref = _reference_forward(x, k2d.astype(np.float32), kernel_size, padding=True)
    assert out.shape == (2, 3, 16, 16)
    # Tolerance covers MXU f32-pass rounding across TPU generations; any real indexing/packing
    # bug produces O(0.3) errors, so the check remains meaningful.
    np.testing.assert_allclose(np.asarray(out), np.asarray(ref), rtol=5e-3, atol=5e-3)

    print("KERNEL_OK")
</pallas_src>

<mosaic_0001>
module attributes {stable_mosaic.version = 11 : i64} {
  func.func @_conv_kernel(%arg0: i32, %arg1: memref<16x96xf32, #tpu.memory_space<vmem>>, %arg2: memref<16x16xf32, #tpu.memory_space<vmem>>, %arg3: memref<96x96xf32, #tpu.memory_space<vmem>>, %arg4: memref<16x96xf32, #tpu.memory_space<vmem>>) attributes {dimension_semantics = [#tpu.dimension_semantics<arbitrary>], iteration_bounds = array<i64: 1>, scalar_prefetch = 0 : i64, scratch_operands = 0 : i64, tpu.core_type = #tpu.core_type<tc>, window_params = [{pipeline_mode = #tpu.pipeline_mode<synchronous>, transform_indices = @transform_0, window_bounds = array<i64: 16, 96>}, {pipeline_mode = #tpu.pipeline_mode<synchronous>, transform_indices = @transform_1, window_bounds = array<i64: 16, 16>}, {pipeline_mode = #tpu.pipeline_mode<synchronous>, transform_indices = @transform_2, window_bounds = array<i64: 96, 96>}, {pipeline_mode = #tpu.pipeline_mode<synchronous>, transform_indices = @transform_3, window_bounds = array<i64: 16, 96>}]} {
    %c0 = arith.constant 0 : index
    %c0_0 = arith.constant 0 : index
    %0 = vector.load %arg1[%c0, %c0_0] : memref<16x96xf32, #tpu.memory_space<vmem>>, vector<16x96xf32>
    %c0_1 = arith.constant 0 : index
    %c0_2 = arith.constant 0 : index
    %1 = vector.load %arg2[%c0_1, %c0_2] : memref<16x16xf32, #tpu.memory_space<vmem>>, vector<16x16xf32>
    %cst = arith.constant dense<0.000000e+00> : vector<16x96xf32>
    %2 = tpu.matmul %1, %0, %cst {dimension_numbers = #tpu.dot_dimension_numbers<[1], [0], [0], [1], [0, 0, 1, 1], [], []>} : vector<16x16xf32>, vector<16x96xf32>, vector<16x96xf32> -> vector<16x96xf32>
    %c0_3 = arith.constant 0 : index
    %c0_4 = arith.constant 0 : index
    %3 = vector.load %arg3[%c0_3, %c0_4] : memref<96x96xf32, #tpu.memory_space<vmem>>, vector<96x96xf32>
    %cst_5 = arith.constant dense<0.000000e+00> : vector<16x96xf32>
    %4 = tpu.matmul %2, %3, %cst_5 {dimension_numbers = #tpu.dot_dimension_numbers<[1], [0], [0], [1], [0, 0, 1, 1], [], []>} : vector<16x96xf32>, vector<96x96xf32>, vector<16x96xf32> -> vector<16x96xf32>
    %c0_6 = arith.constant 0 : index
    %c0_7 = arith.constant 0 : index
    %5 = vector.load %arg4[%c0_6, %c0_7] : memref<16x96xf32, #tpu.memory_space<vmem>>, vector<16x96xf32>
    tpu.vector_store %arg4[%c0_6, %c0_7], %4 {strides = array<i32>} : memref<16x96xf32, #tpu.memory_space<vmem>>, vector<16x96xf32>,
    return
  }
  func.func @transform_0(%arg0: i32) -> (i32, i32) {
    %c0_i32 = arith.constant 0 : i32
    %c0_i32_0 = arith.constant 0 : i32
    %c0_i32_1 = arith.constant 0 : i32
    return %c0_i32, %c0_i32_0 : i32, i32
  }
  func.func @transform_1(%arg0: i32) -> (i32, i32) {
    %c0_i32 = arith.constant 0 : i32
    %c0_i32_0 = arith.constant 0 : i32
    %c0_i32_1 = arith.constant 0 : i32
    return %c0_i32, %c0_i32_0 : i32, i32
  }
  func.func @transform_2(%arg0: i32) -> (i32, i32) {
    %c0_i32 = arith.constant 0 : i32
    %c0_i32_0 = arith.constant 0 : i32
    %c0_i32_1 = arith.constant 0 : i32
    return %c0_i32, %c0_i32_0 : i32, i32
  }
  func.func @transform_3(%arg0: i32) -> (i32, i32) {
    %c0_i32 = arith.constant 0 : i32
    %c0_i32_0 = arith.constant 0 : i32
    %c0_i32_1 = arith.constant 0 : i32
    return %c0_i32, %c0_i32_0 : i32, i32
  }
}

</mosaic_0001>

<llo_original>
// kernel: tpu_custom_call.1
$region0: #{tpu_custom_call.1}
  #allocation0 [shape = 'u32[]', space=smem, size = 0x4, offset = 0x4, fixed_abs, tag = 'smem constant byte address 0x4 - core index']
  #allocation1 [shape = 'u32[144,128]{1,0:T(1,128)}', space=vmem, size = 0x12000, scoped, tag = 'internal scratch']
  %s0 = inlined_call_operand.hbm [shape: f32[16,96], index: 0, kind: input, shape index: {}]
  %s1 = inlined_call_operand.hbm [shape: f32[16,16], index: 1, kind: input, shape index: {}]
  %s2 = inlined_call_operand.hbm [shape: f32[96,96], index: 2, kind: input, shape index: {}]
  %s3 = inlined_call_operand.hbm [shape: f32[16,96], index: 3, kind: output, shape index: {}]
  %s4 = sld [smem:[#allocation0]]
  $region34: #{tpu_custom_call.1} parent=0
    _
  %s6 = ssub.s32 1, %s4
  %s7 = scalar_select 0, %s6, %s4
  $region1: #{tpu_custom_call.1} parent=0
    #allocation2 [shape = 'u8[8192]{0}', space=vmem, size = 0x2000, scoped, tag = 'input window, operand 0, single buffered']
    #allocation3 [shape = 's32[1]{0}', space=sflag, size = 0x4, scoped, tag = 'scoped memory for tpu_custom_call.1']
    #allocation4 [shape = 's32[1]{0}', space=sflag, size = 0x4, scoped, tag = 'scoped memory for tpu_custom_call.1']
    #allocation5 [shape = 'u8[8192]{0}', space=vmem, size = 0x2000, scoped, tag = 'input window, operand 1, single buffered']
    #allocation6 [shape = 's32[1]{0}', space=sflag, size = 0x4, scoped, tag = 'scoped memory for tpu_custom_call.1']
    #allocation7 [shape = 'u8[49152]{0}', space=vmem, size = 0xc000, scoped, tag = 'input window, operand 2, single buffered']
    #allocation8 [shape = 'u8[8192]{0}', space=vmem, size = 0x2000, scoped, tag = 'output window, operand 0, single buffered']
    %8 = vsyncpa [#allocation3], 0
    %9 = vsyncpa [#allocation6], 0
    %10 = vsyncpa [#allocation4], 0
    // Predicated region
    $region2: #{tpu_custom_call.1} parent=1 // pred_check
      _
    $region3: #{tpu_custom_call.1} parent=1 // pred_check_branch
      %12 = sbr.rel (0) target = $region5
    $region4: #{tpu_custom_call.1} parent=1 // pred_region
      %s14 = ssub.s32 256, 256
      %15 = vsyncadd [#allocation3], %s14
      %s16 = sshll.u32 [#allocation2], 4
      %s17 = int_to_ptr.vmem [resolvable:$true] %s16
      %22 = dma.hbm_to_vmem [thread:$0]  %s0, 256, %s17, [#allocation3], 128, 128, 8
    $region5: #{tpu_custom_call.1} parent=1 // pred_fallthru
      _
    // Predicated region
    $region6: #{tpu_custom_call.1} parent=1 // pred_check
      _
    $region7: #{tpu_custom_call.1} parent=1 // pred_check_branch
      %24 = sbr.rel (0) target = $region9
    $region8: #{tpu_custom_call.1} parent=1 // pred_region
      %s26 = ssub.s32 256, 256
      %27 = vsyncadd [#allocation6], %s26
      %s28 = sshll.u32 [#allocation5], 4
      %s29 = int_to_ptr.vmem [resolvable:$true] %s28
      %34 = dma.hbm_to_vmem [thread:$0]  %s1, 256, %s29, [#allocation6], 128, 128, 8
    $region9: #{tpu_custom_call.1} parent=1 // pred_fallthru
      _
    // Predicated region
    $region10: #{tpu_custom_call.1} parent=1 // pred_check
      _
    $region11: #{tpu_custom_call.1} parent=1 // pred_check_branch
      %36 = sbr.rel (0) target = $region13
    $region12: #{tpu_custom_call.1} parent=1 // pred_region
      %s38 = ssub.s32 1536, 1536
      %39 = vsyncadd [#allocation6], %s38
      %s40 = sshll.u32 [#allocation7], 4
      %s41 = int_to_ptr.vmem [resolvable:$true] %s40
      %46 = dma.hbm_to_vmem [thread:$0]  %s2, 1536, %s41, [#allocation6], 128, 128, 8
    $region13: #{tpu_custom_call.1} parent=1 // pred_fallthru
      _
    // Predicated region
    $region14: #{tpu_custom_call.1} parent=1 // pred_check
      _
    $region15: #{tpu_custom_call.1} parent=1 // pred_check_branch
      %48 = sbr.rel (0) target = $region17
    $region16: #{tpu_custom_call.1} parent=1 // pred_region
      %49 = dma.done [#allocation3], 256
    $region17: #{tpu_custom_call.1} parent=1 // pred_fallthru
      _
    // Predicated region
    $region18: #{tpu_custom_call.1} parent=1 // pred_check
      _
    $region19: #{tpu_custom_call.1} parent=1 // pred_check_branch
      %51 = sbr.rel (0) target = $region21
    $region20: #{tpu_custom_call.1} parent=1 // pred_region
      %52 = dma.done [#allocation6], 256
    $region21: #{tpu_custom_call.1} parent=1 // pred_fallthru
      _
    // Predicated region
    $region22: #{tpu_custom_call.1} parent=1 // pred_check
      _
    $region23: #{tpu_custom_call.1} parent=1 // pred_check_branch
      %54 = sbr.rel (0) target = $region25
    $region24: #{tpu_custom_call.1} parent=1 // pred_region
      %55 = dma.done [#allocation6], 1536
    $region25: #{tpu_custom_call.1} parent=1 // pred_fallthru
      _
    %v56 = vld [vmem:[#allocation2] sm:$0xff]
    %v57 = vld [vmem:[#allocation2 + $0x8] sm:$0xff]
    %v58 = vld [vmem:[#allocation5] sm:$0xff]
    %v59 = vld [vmem:[#allocation5 + $0x8] sm:$0xff]
    %vm60 = vcmask 130048
    %v62 = vsel %vm60, %v58, 0
    %v65 = vsel %vm60, %v59, 0
    %67 = vmatprep.subr.mxu0 0.0
    %68 = vmatpush1.msra.mxu0 0.0
    %69 = vmatprep.subr.mxu0 0.0
    %70 = vmatpush1.msra.mxu0 0.0
    %71 = vmatprep.subr.mxu0 0.0
    %72 = vmatpush1.msra.mxu0 0.0
    %73 = vmatprep.subr.mxu0 0.0
    %74 = vmatpush1.msra.mxu0 0.0
    %75 = vmatprep.subr.mxu0 0.0
    %76 = vmatpush1.msra.mxu0 0.0
    %77 = vmatprep.subr.mxu0 0.0
    %78 = vmatpush1.msra.mxu0 0.0
    %79 = vmatprep.subr.mxu0 0.0
    %80 = vmatpush1.msra.mxu0 0.0
    %81 = vmatprep.subr.mxu0 0.0
    %82 = vmatpush1.msra.mxu0 0.0
    %83 = vmatprep.subr.mxu0 0.0
    %84 = vmatpush1.msra.mxu0 0.0
    %85 = vmatprep.subr.mxu0 0.0
    %86 = vmatpush1.msra.mxu0 0.0
    %87 = vmatprep.subr.mxu0 0.0
    %88 = vmatpush1.msra.mxu0 0.0
    %89 = vmatprep.subr.mxu0 0.0
    %90 = vmatpush1.msra.mxu0 0.0
    %91 = vmatprep.subr.mxu0 0.0
    %92 = vmatpush1.msra.mxu0 0.0
    %93 = vmatprep.subr.mxu0 0.0
    %94 = vmatpush1.msra.mxu0 0.0
    %95 = vmatprep.subr.mxu0 0.0
    %96 = vmatpush1.msra.mxu0 %v57
    %97 = vmatprep.subr.mxu0 0.0
    %98 = vmatpush1.msra.mxu0 %v56
    %99 = vmatprep.subr.mxu0 0.0
    %100 = vmatpush2.msra.mxu0 0.0
    %101 = vmatprep.subr.mxu0 0.0
    %102 = vmatpush2.msra.mxu0 0.0
    %103 = vmatprep.subr.mxu0 0.0
    %104 = vmatpush2.msra.mxu0 0.0
    %105 = vmatprep.subr.mxu0 0.0
    %106 = vmatpush2.msra.mxu0 0.0
    %107 = vmatprep.subr.mxu0 0.0
    %108 = vmatpush2.msra.mxu0 0.0
    %109 = vmatprep.subr.mxu0 0.0
    %110 = vmatpush2.msra.mxu0 0.0
    %111 = vmatprep.subr.mxu0 0.0
    %112 = vmatpush2.msra.mxu0 0.0
    %113 = vmatprep.subr.mxu0 0.0
    %114 = vmatpush2.msra.mxu0 0.0
    %115 = vmatprep.subr.mxu0 0.0
    %116 = vmatpush2.msra.mxu0 0.0
    %117 = vmatprep.subr.mxu0 0.0
    %118 = vmatpush2.msra.mxu0 0.0
    %119 = vmatprep.subr.mxu0 0.0
    %120 = vmatpush2.msra.mxu0 0.0
    %121 = vmatprep.subr.mxu0 0.0
    %122 = vmatpush2.msra.mxu0 0.0
    %123 = vmatprep.subr.mxu0 0.0
    %124 = vmatpush2.msra.mxu0 0.0
    %125 = vmatprep.subr.mxu0 0.0
    %126 = vmatpush2.msra.mxu0 0.0
    %127 = vmatprep.subr.mxu0 0.0
    %128 = vmatpush2.msra.mxu0 0.0
    %129 = vmatprep.subr.mxu0 0.0
    %130 = vmatpush2.msra.mxu0 0.0
    %131 = vmatprep.mubr.f32.mxu0 0.0
    %132 = vmatmul.mubr.f32.gmra.mxu0 %v62
    %v133 = vpop.f32.mrf.mxu0
    %v134 = vadd.f32 0.0, %v133
    %v135 = vpop.f32.mrf.mxu0
    %136 = vmatprep.mubr.f32.mxu0 0.0
    %137 = vmatmul.mubr.f32.gmra.mxu0 %v65
    %v138 = vpop.f32.mrf.mxu0
    %v139 = vadd.f32 0.0, %v138
    %v140 = vpop.f32.mrf.mxu0
    %141 = vdwg.mxu0
    %v142 = vld [vmem:[#allocation7] sm:$0xff]
    %v143 = vld [vmem:[#allocation7 + $0x8] sm:$0xff]
    %v144 = vld [vmem:[#allocation7 + $0x10] sm:$0xff]
    %v145 = vld [vmem:[#allocation7 + $0x18] sm:$0xff]
    %v146 = vld [vmem:[#allocation7 + $0x20] sm:$0xff]
    %v147 = vld [vmem:[#allocation7 + $0x28] sm:$0xff]
    %v148 = vld [vmem:[#allocation7 + $0x30] sm:$0xff]
    %v149 = vld [vmem:[#allocation7 + $0x38] sm:$0xff]
    %v150 = vld [vmem:[#allocation7 + $0x40] sm:$0xff]
    %v151 = vld [vmem:[#allocation7 + $0x48] sm:$0xff]
    %v152 = vld [vmem:[#allocation7 + $0x50] sm:$0xff]
    %v153 = vld [vmem:[#allocation7 + $0x58] sm:$0xff]
    %vm154 = vcmask 785408
    %v156 = vsel %vm154, %v134, 0
    %v159 = vsel %vm154, %v139, 0
    %161 = vmatprep.subr.mxu0 0.0
    %162 = vmatpush1.msra.mxu0 0.0
    %163 = vmatprep.subr.mxu0 0.0
    %164 = vmatpush1.msra.mxu0 0.0
    %165 = vmatprep.subr.mxu0 0.0
    %166 = vmatpush1.msra.mxu0 0.0
    %167 = vmatprep.subr.mxu0 0.0
    %168 = vmatpush1.msra.mxu0 0.0
    %169 = vmatprep.subr.mxu0 0.0
    %170 = vmatpush1.msra.mxu0 %v153
    %171 = vmatprep.subr.mxu0 0.0
    %172 = vmatpush1.msra.mxu0 %v152
    %173 = vmatprep.subr.mxu0 0.0
    %174 = vmatpush1.msra.mxu0 %v151
    %175 = vmatprep.subr.mxu0 0.0
    %176 = vmatpush1.msra.mxu0 %v150
    %177 = vmatprep.subr.mxu0 0.0
    %178 = vmatpush1.msra.mxu0 %v149
    %179 = vmatprep.subr.mxu0 0.0
    %180 = vmatpush1.msra.mxu0 %v148
    %181 = vmatprep.subr.mxu0 0.0
    %182 = vmatpush1.msra.mxu0 %v147
    %183 = vmatprep.subr.mxu0 0.0
    %184 = vmatpush1.msra.mxu0 %v146
    %185 = vmatprep.subr.mxu0 0.0
    %186 = vmatpush1.msra.mxu0 %v145
    %187 = vmatprep.subr.mxu0 0.0
    %188 = vmatpush1.msra.mxu0 %v144
    %189 = vmatprep.subr.mxu0 0.0
    %190 = vmatpush1.msra.mxu0 %v143
    %191 = vmatprep.subr.mxu0 0.0
    %192 = vmatpush1.msra.mxu0 %v142
    %193 = vmatprep.subr.mxu0 0.0
    %194 = vmatpush2.msra.mxu0 0.0
    %195 = vmatprep.subr.mxu0 0.0
    %196 = vmatpush2.msra.mxu0 0.0
    %197 = vmatprep.subr.mxu0 0.0
    %198 = vmatpush2.msra.mxu0 0.0
    %199 = vmatprep.subr.mxu0 0.0
    %200 = vmatpush2.msra.mxu0 0.0
    %201 = vmatprep.subr.mxu0 0.0
    %202 = vmatpush2.msra.mxu0 0.0
    %203 = vmatprep.subr.mxu0 0.0
    %204 = vmatpush2.msra.mxu0 0.0
    %205 = vmatprep.subr.mxu0 0.0
    %206 = vmatpush2.msra.mxu0 0.0
    %207 = vmatprep.subr.mxu0 0.0
    %208 = vmatpush2.msra.mxu0 0.0
    %209 = vmatprep.subr.mxu0 0.0
    %210 = vmatpush2.msra.mxu0 0.0
    %211 = vmatprep.subr.mxu0 0.0
    %212 = vmatpush2.msra.mxu0 0.0
    %213 = vmatprep.subr.mxu0 0.0
    %214 = vmatpush2.msra.mxu0 0.0
    %215 = vmatprep.subr.mxu0 0.0
    %216 = vmatpush2.msra.mxu0 0.0
    %217 = vmatprep.subr.mxu0 0.0
    %218 = vmatpush2.msra.mxu0 0.0
    %219 = vmatprep.subr.mxu0 0.0
    %220 = vmatpush2.msra.mxu0 0.0
    %221 = vmatprep.subr.mxu0 0.0
    %222 = vmatpush2.msra.mxu0 0.0
    %223 = vmatprep.subr.mxu0 0.0
    %224 = vmatpush2.msra.mxu0 0.0
    %225 = vmatprep.mubr.f32.mxu0 0.0
    %226 = vmatmul.mubr.f32.gmra.mxu0 %v156
    %v227 = vpop.f32.mrf.mxu0
    %v228 = vadd.f32 0.0, %v227
    %v229 = vpop.f32.mrf.mxu0
    %230 = vmatprep.mubr.f32.mxu0 0.0
    %231 = vmatmul.mubr.f32.gmra.mxu0 %v159
    %v232 = vpop.f32.mrf.mxu0
    %v233 = vadd.f32 0.0, %v232
    %v234 = vpop.f32.mrf.mxu0
    %235 = vdwg.mxu0
    %236 = vst.msk [vmem:[#allocation8] sm:$0xff] %vm154, %v228
    %237 = vst.msk [vmem:[#allocation8 + $0x8] sm:$0xff] %vm154, %v233
    // Predicated region
    $region26: #{tpu_custom_call.1} parent=1 // pred_check
      _
    $region27: #{tpu_custom_call.1} parent=1 // pred_check_branch
      %239 = sbr.rel (0) target = $region29
    $region28: #{tpu_custom_call.1} parent=1 // pred_region
      %s241 = ssub.s32 256, 256
      %242 = vsyncadd [#allocation4], %s241
      %s243 = sshll.u32 [#allocation8], 4
      %s244 = int_to_ptr.vmem [resolvable:$true] %s243
      %249 = dma.vmem_to_hbm [thread:$0]  %s244, 256, %s3, [#allocation4], 128, 128, 8
    $region29: #{tpu_custom_call.1} parent=1 // pred_fallthru
      _
    // Predicated region
    $region30: #{tpu_custom_call.1} parent=1 // pred_check
      _
    $region31: #{tpu_custom_call.1} parent=1 // pred_check_branch
      %251 = sbr.rel (0) target = $region33
    $region32: #{tpu_custom_call.1} parent=1 // pred_region
      %252 = dma.done [#allocation4], 256
    $region33: #{tpu_custom_call.1} parent=1 // pred_fallthru
      _
    %253 = vsyncpa [#allocation3], 1
    %254 = vsyncpa [#allocation6], 1
    %255 = vsyncpa [#allocation4], 1

</llo_original>
